<compile_context>
chip_gen: v5e
topology: v5e:2x2
jax: 0.10.0
libtpu: 0.0.40
codegen_flags: <defaults>
</compile_context>

<pallas_src>
import functools

import jax
import jax.numpy as jnp
from jax.experimental import pallas as pl
from jax.experimental.pallas import tpu as pltpu

_TAPS = tuple((dy, dx) for dy in range(3) for dx in range(3))


def _pick_row_tile(extent, multiple, target):
    """Largest t <= min(extent, target) with multiple | t and t | extent."""
    target = min(extent, max(target, multiple))
    t = (target // multiple) * multiple
    while t >= multiple:
        if extent % t == 0:
            return t
        t -= multiple
    return extent


def _vmem_limit(nbytes):
    """Explicit scoped-VMEM budget: 2x headroom over the estimated need."""
    return int(min(100 * 2**20, max(16 * 2**20, 2 * nbytes)))


# -----------------------------------------------------------------------------
# Kernel 1: row-tiled 3x3 conv + folded BN + activation (used for conv_g)
# -----------------------------------------------------------------------------
def _conv3x3_bn_act_kernel(x_ref, w_ref, s_ref, b_ref, o_ref, pad_ref, im_ref,
                           *, th, act):
    """One (batch, row-tile) step.

    x_ref  : (1, H, W, Cin)    f32   whole image, resident across row tiles
    w_ref  : (9*Cin, Cout)     bf16  tap-major HWIO flattening
    s_ref  : (1, Cout)         f32   folded BN scale
    b_ref  : (1, Cout)         f32   folded BN bias
    o_ref  : (1, th, W, Cout)  bf16
    pad_ref: (th+2, W+2, Cin)  f32   row tile + 1-row halo, zero-padded
    im_ref : (th*W, 9*Cin)     bf16  im2col scratch (no jnp.concatenate)
    """
    _, H, W, Cin = x_ref.shape
    Cout = o_ref.shape[-1]
    r0 = pl.multiple_of(pl.program_id(1) * th, th)

    # Re-zero the halo columns every step (scratch persists across grid steps
    # and is per-core under megacore split, so a program_id==0 init is unsafe).
    pad_ref[:, 0:1, :] = jnp.zeros((th + 2, 1, Cin), jnp.float32)
    pad_ref[:, W + 1:W + 2, :] = jnp.zeros((th + 2, 1, Cin), jnp.float32)

    def edge_row(ri):
        # Row `ri` of the image, or zeros when outside it (image boundary).
        valid = jnp.logical_and(ri >= 0, ri < H)
        src = jnp.clip(ri, 0, H - 1)
        return x_ref[0, pl.ds(src, 1), :, :] * jnp.where(valid, 1.0, 0.0)

    pad_ref[0:1, 1:W + 1, :] = edge_row(r0 - 1)
    pad_ref[1:th + 1, 1:W + 1, :] = x_ref[0, pl.ds(r0, th), :, :]
    pad_ref[th + 1:th + 2, 1:W + 1, :] = edge_row(r0 + th)

    # im2col into a bf16 scratch slab, then ONE MXU matmul with K = 9*Cin.
    for t, (dy, dx) in enumerate(_TAPS):
        im_ref[:, t * Cin:(t + 1) * Cin] = (
            pad_ref[dy:dy + th, dx:dx + W, :]
            .reshape(th * W, Cin).astype(jnp.bfloat16))

    acc = jnp.dot(im_ref[...], w_ref[...], preferred_element_type=jnp.float32)
    y = acc * s_ref[...] + b_ref[...]
    if act == "relu":
        y = jnp.maximum(y, 0.0)
    elif act == "sigmoid":
        y = jax.nn.sigmoid(y)
    o_ref[...] = y.reshape(1, th, W, Cout).astype(o_ref.dtype)


def conv3x3_bn_act(x, w, scale, bias, act="relu", out_dtype=jnp.bfloat16,
                   tile_h=None):
    """x: (N, H, W, Cin) f32 NHWC; w: (3, 3, Cin, Cout) HWIO."""
    N, H, W, Cin = x.shape
    Cout = w.shape[-1]
    th = _pick_row_tile(H, 1, tile_h or 64)

    w_r = w.reshape(9 * Cin, Cout).astype(jnp.bfloat16)
    s_r = scale.reshape(1, Cout).astype(jnp.float32)
    b_r = bias.reshape(1, Cout).astype(jnp.float32)

    in_bytes = H * W * Cin * 4 + 9 * Cin * Cout * 2 + 2 * Cout * 4
    out_bytes = th * W * Cout * 2
    scratch_bytes = ((th + 2) * (W + 2) * Cin * 4       # pad
                     + th * W * 9 * Cin * 2             # im2col
                     + th * W * Cout * 4)               # matmul result value
    limit = _vmem_limit(2 * (in_bytes + out_bytes) + scratch_bytes)

    kernel = functools.partial(_conv3x3_bn_act_kernel, th=th, act=act)
    return pl.pallas_call(
        kernel,
        out_shape=jax.ShapeDtypeStruct((N, H, W, Cout), out_dtype),
        grid=(N, H // th),
        in_specs=[
            pl.BlockSpec((1, H, W, Cin), lambda n, r: (n, 0, 0, 0)),
            pl.BlockSpec((9 * Cin, Cout), lambda n, r: (0, 0)),
            pl.BlockSpec((1, Cout), lambda n, r: (0, 0)),
            pl.BlockSpec((1, Cout), lambda n, r: (0, 0)),
        ],
        out_specs=pl.BlockSpec((1, th, W, Cout), lambda n, r: (n, r, 0, 0)),
        scratch_shapes=[
            pltpu.VMEM((th + 2, W + 2, Cin), jnp.float32),
            pltpu.VMEM((th * W, 9 * Cin), jnp.bfloat16),
        ],
        compiler_params=pltpu.CompilerParams(
            dimension_semantics=("parallel", "parallel"),
            vmem_limit_bytes=limit),
    )(x, w_r, s_r, b_r)


# -----------------------------------------------------------------------------
# Kernel 2: fused  conv_x -> [nearest_up(g_conv) + x_conv] -> conv3x3(Cout=1)
#           -> BN -> sigmoid -> x * att     (row-tiled; x_conv never hits HBM)
# -----------------------------------------------------------------------------
def _fused_attention_kernel(g_ref, x_ref, wx_ref, sx_ref, bx_ref, wa_ref,
                            ba_ref, o_ref, padx_ref, im_ref, pads_ref,
                            *, th, fh, fw):
    """One (batch, row-tile) step.

    g_ref   : (1, Hg, Wg, Ch)   bf16  coarse g_conv, resident per batch
    x_ref   : (1, H, W, Cin)    f32   original x, resident per batch
    wx_ref  : (9*Cin, Ch)       bf16  conv_x weights (tap-major)
    sx_ref  : (1, Ch)           f32   conv_x folded BN scale
    bx_ref  : (1, Ch)           f32   conv_x folded BN bias
    wa_ref  : (9, Ch)           f32   attention conv weights (BN scale folded)
    ba_ref  : (1, 1)            f32   attention folded BN bias
    o_ref   : (1, th, W, Cin)   f32   x * att
    padx_ref: (th+4, W+2, Cin)  f32   x rows [r0-2, r0+th+2) with zero halo
    im_ref  : ((th+2)*W, 9*Cin) bf16  im2col scratch for conv_x
    pads_ref: (th+2, W+2, Ch)   f32   s = up(g_conv)+x_conv rows [r0-1, r0+th+1)
    """
    _, Hg, Wg, Ch = g_ref.shape
    _, H, W, Cin = x_ref.shape
    rt = th + 2                       # conv_x rows computed per tile (+halo)
    thg = th // fh
    r0 = pl.multiple_of(pl.program_id(1) * th, th)
    rg0 = r0 // fh

    # ---- stage 1: padded x rows (2-row halo: conv_x output is re-convolved) --
    padx_ref[:, 0:1, :] = jnp.zeros((th + 4, 1, Cin), jnp.float32)
    padx_ref[:, W + 1:W + 2, :] = jnp.zeros((th + 4, 1, Cin), jnp.float32)

    def x_edge_row(ri):
        valid = jnp.logical_and(ri >= 0, ri < H)
        src = jnp.clip(ri, 0, H - 1)
        return x_ref[0, pl.ds(src, 1), :, :] * jnp.where(valid, 1.0, 0.0)

    x_rows = x_ref[0, pl.ds(r0, th), :, :]                  # (th, W, Cin) f32
    padx_ref[0:1, 1:W + 1, :] = x_edge_row(r0 - 2)
    padx_ref[1:2, 1:W + 1, :] = x_edge_row(r0 - 1)
    padx_ref[2:th + 2, 1:W + 1, :] = x_rows
    padx_ref[th + 2:th + 3, 1:W + 1, :] = x_edge_row(r0 + th)
    padx_ref[th + 3:th + 4, 1:W + 1, :] = x_edge_row(r0 + th + 1)

    # ---- stage 2: conv_x for rows [r0-1, r0+th] : im2col + ONE MXU matmul ----
    for t, (dy, dx) in enumerate(_TAPS):
        im_ref[:, t * Cin:(t + 1) * Cin] = (
            padx_ref[dy:dy + rt, dx:dx + W, :]
            .reshape(rt * W, Cin).astype(jnp.bfloat16))
    acc = jnp.dot(im_ref[...], wx_ref[...], preferred_element_type=jnp.float32)
    xc = jnp.maximum(acc * sx_ref[...] + bx_ref[...], 0.0).reshape(rt, W, Ch)

    # ---- stage 3: s = nearest_up(g_conv) + x_conv, into padded scratch -------
    pads_ref[:, 0:1, :] = jnp.zeros((th + 2, 1, Ch), jnp.float32)
    pads_ref[:, W + 1:W + 2, :] = jnp.zeros((th + 2, 1, Ch), jnp.float32)

    def up_cols(gr):                  # (k, Wg, Ch) -> (k, W, Ch), one store
        if fw == 1:
            return gr
        k = gr.shape[0]
        return jnp.broadcast_to(gr[:, :, None, :],
                                (k, Wg, fw, Ch)).reshape(k, W, Ch)

    gc = g_ref[0, pl.ds(rg0, thg), :, :].astype(jnp.float32)     # (thg, Wg, Ch)
    if fh == 1:
        g_rows = gc
    else:
        g_rows = jnp.broadcast_to(gc[:, None, :, :],
                                  (thg, fh, Wg, Ch)).reshape(th, Wg, Ch)
    pads_ref[1:th + 1, 1:W + 1, :] = up_cols(g_rows) + xc[1:th + 1]

    # Halo rows of s: previous/next tile's rows, or zeros at the image edge.
    top_m = jnp.where(r0 > 0, 1.0, 0.0)
    gc_top = g_ref[0, pl.ds(jnp.maximum(rg0 - 1, 0), 1), :, :].astype(jnp.float32)
    pads_ref[0:1, 1:W + 1, :] = top_m * (up_cols(gc_top) + xc[0:1])

    bot_m = jnp.where(r0 + th < H, 1.0, 0.0)
    gc_bot = g_ref[0, pl.ds(jnp.minimum(rg0 + thg, Hg - 1), 1), :, :].astype(
        jnp.float32)
    pads_ref[th + 1:th + 2, 1:W + 1, :] = bot_m * (up_cols(gc_bot)
                                                   + xc[th + 1:th + 2])

    # ---- stage 4: Cout=1 3x3 conv: 9 per-channel VPU FMAs + ONE lane reduce --
    w9 = wa_ref[...]                                             # (9, Ch) f32
    part = pads_ref[0:th, 0:W, :] * w9[0]                        # (th, W, Ch)
    for t in range(1, 9):
        dy, dx = _TAPS[t]
        part = part + pads_ref[dy:dy + th, dx:dx + W, :] * w9[t]
    logit = jnp.sum(part, axis=-1, keepdims=True) + ba_ref[...]  # (th, W, 1)
    att = jax.nn.sigmoid(logit)

    # ---- stage 5: final multiply + store --------------------------------------
    o_ref[...] = (x_rows * att).reshape(1, th, W, Cin)


def nearest_upsample(g_nhwc, size):
    # F.interpolate(mode='nearest'): src = floor(dst * in / out).
    Hg, Wg = g_nhwc.shape[1], g_nhwc.shape[2]
    H, W = size
    rows = (jnp.arange(H) * Hg) // H
    cols = (jnp.arange(W) * Wg) // W
    return g_nhwc[:, rows][:, :, cols]


def fused_attention(g_conv, x, wx, sx, bx, wa, sa, ba, tile_h=None):
    """Returns x * sigmoid(BN(conv3x3(nearest_up(g_conv) + conv_x(x))))."""
    N, H, W, Cin = x.shape
    Ch = g_conv.shape[-1]
    Hg, Wg = g_conv.shape[1], g_conv.shape[2]

    if H % Hg == 0 and W % Wg == 0:
        fh, fw = H // Hg, W // Wg
    else:
        # TODO(synk): non-integer nearest-upsample factors fall back to an XLA
        # gather producing the fine-resolution g_conv (one extra HBM round trip).
        g_conv = nearest_upsample(g_conv, (H, W))
        Hg, Wg, fh, fw = H, W, 1, 1

    th = _pick_row_tile(H, fh, tile_h or 64)
    assert H % th == 0 and th % fh == 0, (H, th, fh)

    wx_r = wx.reshape(9 * Cin, Ch).astype(jnp.bfloat16)
    sx_r = sx.reshape(1, Ch).astype(jnp.float32)
    bx_r = bx.reshape(1, Ch).astype(jnp.float32)
    # Cout == 1 -> fold the scalar BN scale into the attention conv weights.
    wa_r = (wa[..., 0] * sa.reshape(())).reshape(9, Ch).astype(jnp.float32)
    ba_r = ba.reshape(1, 1).astype(jnp.float32)

    gbytes = g_conv.dtype.itemsize
    in_bytes = (Hg * Wg * Ch * gbytes + H * W * Cin * 4
                + 9 * Cin * Ch * 2 + 2 * Ch * 4 + 9 * Ch * 4 + 4)
    out_bytes = th * W * Cin * 4
    scratch_bytes = ((th + 4) * (W + 2) * Cin * 4        # padded x
                     + (th + 2) * W * 9 * Cin * 2        # im2col
                     + (th + 2) * (W + 2) * Ch * 4       # padded s
                     + (th + 2) * W * Ch * 4             # x_conv value
                     + th * W * Ch * 4)                  # tap partials
    limit = _vmem_limit(2 * (in_bytes + out_bytes) + scratch_bytes)

    kernel = functools.partial(_fused_attention_kernel, th=th, fh=fh, fw=fw)
    return pl.pallas_call(
        kernel,
        out_shape=jax.ShapeDtypeStruct((N, H, W, Cin), jnp.float32),
        grid=(N, H // th),
        in_specs=[
            pl.BlockSpec((1, Hg, Wg, Ch), lambda n, r: (n, 0, 0, 0)),
            pl.BlockSpec((1, H, W, Cin), lambda n, r: (n, 0, 0, 0)),
            pl.BlockSpec((9 * Cin, Ch), lambda n, r: (0, 0)),
            pl.BlockSpec((1, Ch), lambda n, r: (0, 0)),
            pl.BlockSpec((1, Ch), lambda n, r: (0, 0)),
            pl.BlockSpec((9, Ch), lambda n, r: (0, 0)),
            pl.BlockSpec((1, 1), lambda n, r: (0, 0)),
        ],
        out_specs=pl.BlockSpec((1, th, W, Cin), lambda n, r: (n, r, 0, 0)),
        scratch_shapes=[
            pltpu.VMEM((th + 4, W + 2, Cin), jnp.float32),
            pltpu.VMEM(((th + 2) * W, 9 * Cin), jnp.bfloat16),
            pltpu.VMEM((th + 2, W + 2, Ch), jnp.float32),
        ],
        compiler_params=pltpu.CompilerParams(
            dimension_semantics=("parallel", "parallel"),
            vmem_limit_bytes=limit),
    )(g_conv, x, wx_r, sx_r, bx_r, wa_r, ba_r)


# -----------------------------------------------------------------------------
# Attention forward (matches the PyTorch module)
# -----------------------------------------------------------------------------
def attention_forward(x_nchw, g_nchw, p, tile_h=None, tile_hg=None):
    x = jnp.transpose(x_nchw, (0, 2, 3, 1))   # -> NHWC
    g = jnp.transpose(g_nchw, (0, 2, 3, 1))

    # conv_g: row-tiled conv+BN+ReLU, bf16 output (dominant inter-kernel tensor)
    g_conv = conv3x3_bn_act(g, p["wg"], p["sg"], p["bg"], "relu",
                            out_dtype=jnp.bfloat16, tile_h=tile_hg)
    # conv_x + upsample + add + Cout=1 conv + sigmoid + multiply, fully fused.
    out = fused_attention(g_conv, x, p["wx"], p["sx"], p["bx"],
                          p["wa"], p["sa"], p["ba"], tile_h=tile_h)
    return jnp.transpose(out, (0, 3, 1, 2))   # back to NCHW


# -----------------------------------------------------------------------------
# Deterministic synthetic parameters (eval-mode BN folded to scale/bias)
# -----------------------------------------------------------------------------
def init_params(key, in_ch, gate_ch, hid_ch):
    ks = jax.random.split(key, 15)

    def conv_w(k, cin, cout):
        fan_in = 9 * cin
        return jax.random.normal(k, (3, 3, cin, cout), jnp.float32) / jnp.sqrt(fan_in)

    def bn_fold(kg, kb, km, kv, c):
        gamma = 1.0 + 0.1 * jax.random.normal(kg, (c,), jnp.float32)
        beta = 0.1 * jax.random.normal(kb, (c,), jnp.float32)
        mean = 0.1 * jax.random.normal(km, (c,), jnp.float32)
        var = jnp.abs(1.0 + 0.1 * jax.random.normal(kv, (c,), jnp.float32))
        scale = gamma / jnp.sqrt(var + 1e-5)
        bias = beta - mean * scale
        return scale, bias

    sx, bx = bn_fold(ks[1], ks[2], ks[3], ks[4], hid_ch)
    sg, bg = bn_fold(ks[6], ks[7], ks[8], ks[9], hid_ch)
    sa, ba = bn_fold(ks[11], ks[12], ks[13], ks[14], 1)
    return dict(
        wx=conv_w(ks[0], in_ch, hid_ch), sx=sx, bx=bx,
        wg=conv_w(ks[5], gate_ch, hid_ch), sg=sg, bg=bg,
        wa=conv_w(ks[10], hid_ch, 1), sa=sa, ba=ba,
    )


# -----------------------------------------------------------------------------
# Pure-JAX references for validation
# -----------------------------------------------------------------------------
def _ref_cba(inp, w, s, b, act, matmul_dtype):
    y = jax.lax.conv_general_dilated(
        inp.astype(matmul_dtype), w.astype(matmul_dtype), (1, 1), "SAME",
        dimension_numbers=("NHWC", "HWIO", "NHWC"),
        preferred_element_type=jnp.float32)
    y = y * s + b
    return jnp.maximum(y, 0.0) if act == "relu" else jax.nn.sigmoid(y)


def ref_forward(x_nchw, g_nchw, p, matmul_dtype=jnp.float32):
    """matmul_dtype applies to the hidden-channel convs (the kernels use bf16
    there, and g_conv is stored in bf16 between kernels); the Cout=1 attention
    conv is f32 in both kernel and reference."""
    x = jnp.transpose(x_nchw, (0, 2, 3, 1))
    g = jnp.transpose(g_nchw, (0, 2, 3, 1))
    xc = _ref_cba(x, p["wx"], p["sx"], p["bx"], "relu", matmul_dtype)
    gc = _ref_cba(g, p["wg"], p["sg"], p["bg"], "relu", matmul_dtype)
    if matmul_dtype == jnp.bfloat16:
        gc = gc.astype(jnp.bfloat16).astype(jnp.float32)   # kernel stores bf16
    gu = nearest_upsample(gc, (x.shape[1], x.shape[2]))
    att = _ref_cba(gu + xc, p["wa"], p["sa"], p["ba"], "sigmoid", jnp.float32)
    return jnp.transpose(x * att, (0, 3, 1, 2))


# -----------------------------------------------------------------------------
if __name__ == "__main__":
    key = jax.random.PRNGKey(0)
    kx, kg, kp = jax.random.split(key, 3)

    N, IN_CH, GATE_CH, HID_CH = 2, 4, 8, 32
    H = W = 16          # x spatial size
    HG = WG = 8         # gate spatial size (coarser; nearest-upsampled 2x)

    x = jax.random.normal(kx, (N, IN_CH, H, W), jnp.float32)      # NCHW
    g = jax.random.normal(kg, (N, GATE_CH, HG, WG), jnp.float32)  # NCHW
    params = init_params(kp, IN_CH, GATE_CH, HID_CH)

    # tile_h=8 / tile_hg=4 force 2 row tiles per batch so the inter-tile halo
    # path (not just the image-boundary path) is exercised and validated.
    out = jax.block_until_ready(
        attention_forward(x, g, params, tile_h=8, tile_hg=4))
    assert out.shape == (N, IN_CH, H, W), out.shape

    # Tight check vs a precision-matched reference (bf16 conv operands, f32
    # accumulation, bf16-rounded g_conv — same math as the kernels).
    ref_bf16 = jax.block_until_ready(ref_forward(x, g, params, jnp.bfloat16))
    err_tight = float(jnp.max(jnp.abs(out - ref_bf16)))
    assert err_tight < 2e-3, err_tight

    # Loose sanity check vs the pure-f32 reference (bounds the bf16 drift).
    ref_f32 = jax.block_until_ready(ref_forward(x, g, params, jnp.float32))
    err_loose = float(jnp.max(jnp.abs(out - ref_f32)))
    assert err_loose < 5e-2, err_loose

    print("KERNEL_OK")
</pallas_src>

<mosaic_0001>
module attributes {stable_mosaic.version = 11 : i64} {
  func.func @_conv3x3_bn_act_kernel(%arg0: i32, %arg1: i32, %arg2: memref<1x8x8x8xf32, #tpu.memory_space<vmem>>, %arg3: memref<72x32xbf16, #tpu.memory_space<vmem>>, %arg4: memref<1x32xf32, #tpu.memory_space<vmem>>, %arg5: memref<1x32xf32, #tpu.memory_space<vmem>>, %arg6: memref<1x4x8x32xbf16, #tpu.memory_space<vmem>>, %arg7: memref<6x10x8xf32, #tpu.memory_space<vmem>>, %arg8: memref<32x72xbf16, #tpu.memory_space<vmem>>) attributes {dimension_semantics = [#tpu.dimension_semantics<parallel>, #tpu.dimension_semantics<parallel>], iteration_bounds = array<i64: 2, 2>, scalar_prefetch = 0 : i64, scratch_operands = 2 : i64, tpu.core_type = #tpu.core_type<tc>, window_params = [{transform_indices = @transform_0, window_bounds = array<i64: 1, 8, 8, 8>}, {pipeline_mode = #tpu.pipeline_mode<synchronous>, transform_indices = @transform_1, window_bounds = array<i64: 72, 32>}, {pipeline_mode = #tpu.pipeline_mode<synchronous>, transform_indices = @transform_2, window_bounds = array<i64: 1, 32>}, {pipeline_mode = #tpu.pipeline_mode<synchronous>, transform_indices = @transform_3, window_bounds = array<i64: 1, 32>}, {transform_indices = @transform_4, window_bounds = array<i64: 1, 4, 8, 32>}]} {
    %c4_i32 = arith.constant 4 : i32
    %0 = arith.muli %arg1, %c4_i32 : i32
    %1 = tpu.assume_multiple %0, 4 : i32
    %cst = arith.constant 0.000000e+00 : f32
    %2 = vector.broadcast %cst : f32 to vector<6x1x8xf32>
    %c0 = arith.constant 0 : index
    %c0_0 = arith.constant 0 : index
    %c0_1 = arith.constant 0 : index
    %3 = vector.load %arg7[%c0, %c0_0, %c0_1] : memref<6x10x8xf32, #tpu.memory_space<vmem>>, vector<6x1x8xf32>
    tpu.vector_store %arg7[%c0, %c0_0, %c0_1], %2 {strides = array<i32>} : memref<6x10x8xf32, #tpu.memory_space<vmem>>, vector<6x1x8xf32>,
    %cst_2 = arith.constant 0.000000e+00 : f32
    %4 = vector.broadcast %cst_2 : f32 to vector<6x1x8xf32>
    %c0_3 = arith.constant 0 : index
    %c9 = arith.constant 9 : index
    %c0_4 = arith.constant 0 : index
    %5 = vector.load %arg7[%c0_3, %c9, %c0_4] : memref<6x10x8xf32, #tpu.memory_space<vmem>>, vector<6x1x8xf32>
    tpu.vector_store %arg7[%c0_3, %c9, %c0_4], %4 {strides = array<i32>} : memref<6x10x8xf32, #tpu.memory_space<vmem>>, vector<6x1x8xf32>,
    %c1_i32 = arith.constant 1 : i32
    %6 = arith.subi %1, %c1_i32 : i32
    %c0_i32 = arith.constant 0 : i32
    %7 = arith.cmpi sge, %6, %c0_i32 : i32
    %c8_i32 = arith.constant 8 : i32
    %8 = arith.cmpi slt, %6, %c8_i32 : i32
    %9 = arith.andi %7, %8 : i1
    %c0_i32_5 = arith.constant 0 : i32
    %c7_i32 = arith.constant 7 : i32
    %10 = arith.maxsi %c0_i32_5, %6 : i32
    %11 = arith.minsi %c7_i32, %10 : i32
    %c0_6 = arith.constant 0 : index
    %12 = arith.index_cast %11 : i32 to index
    %c0_7 = arith.constant 0 : index
    %c0_8 = arith.constant 0 : index
    %13 = vector.load %arg2[%c0_6, %12, %c0_7, %c0_8] : memref<1x8x8x8xf32, #tpu.memory_space<vmem>>, vector<1x1x8x8xf32>
    %14 = vector.shape_cast %13 : vector<1x1x8x8xf32> to vector<1x8x8xf32>
    %cst_9 = arith.constant 1.000000e+00 : f32
    %cst_10 = arith.constant 0.000000e+00 : f32
    %15 = arith.select %9, %cst_9, %cst_10 : f32
    %16 = vector.broadcast %15 : f32 to vector<1x8x8xf32>
    %17 = arith.mulf %14, %16 : vector<1x8x8xf32>
    %c0_11 = arith.constant 0 : index
    %c1 = arith.constant 1 : index
    %c0_12 = arith.constant 0 : index
    %18 = vector.load %arg7[%c0_11, %c1, %c0_12] : memref<6x10x8xf32, #tpu.memory_space<vmem>>, vector<1x8x8xf32>
    tpu.vector_store %arg7[%c0_11, %c1, %c0_12], %17 {strides = array<i32>} : memref<6x10x8xf32, #tpu.memory_space<vmem>>, vector<1x8x8xf32>,
    %c0_13 = arith.constant 0 : index
    %19 = arith.index_cast %1 : i32 to index
    %c0_14 = arith.constant 0 : index
    %c0_15 = arith.constant 0 : index
    %20 = vector.load %arg2[%c0_13, %19, %c0_14, %c0_15] : memref<1x8x8x8xf32, #tpu.memory_space<vmem>>, vector<1x4x8x8xf32>
    %21 = vector.shape_cast %20 : vector<1x4x8x8xf32> to vector<4x8x8xf32>
    %c1_16 = arith.constant 1 : index
    %c1_17 = arith.constant 1 : index
    %c0_18 = arith.constant 0 : index
    %22 = vector.load %arg7[%c1_16, %c1_17, %c0_18] : memref<6x10x8xf32, #tpu.memory_space<vmem>>, vector<4x8x8xf32>
    tpu.vector_store %arg7[%c1_16, %c1_17, %c0_18], %21 {strides = array<i32>} : memref<6x10x8xf32, #tpu.memory_space<vmem>>, vector<4x8x8xf32>,
    %c4_i32_19 = arith.constant 4 : i32
    %23 = arith.addi %1, %c4_i32_19 : i32
    %c0_i32_20 = arith.constant 0 : i32
    %24 = arith.cmpi sge, %23, %c0_i32_20 : i32
    %c8_i32_21 = arith.constant 8 : i32
    %25 = arith.cmpi slt, %23, %c8_i32_21 : i32
    %26 = arith.andi %24, %25 : i1
    %c0_i32_22 = arith.constant 0 : i32
    %c7_i32_23 = arith.constant 7 : i32
    %27 = arith.maxsi %c0_i32_22, %23 : i32
    %28 = arith.minsi %c7_i32_23, %27 : i32
    %c0_24 = arith.constant 0 : index
    %29 = arith.index_cast %28 : i32 to index
    %c0_25 = arith.constant 0 : index
    %c0_26 = arith.constant 0 : index
    %30 = vector.load %arg2[%c0_24, %29, %c0_25, %c0_26] : memref<1x8x8x8xf32, #tpu.memory_space<vmem>>, vector<1x1x8x8xf32>
    %31 = vector.shape_cast %30 : vector<1x1x8x8xf32> to vector<1x8x8xf32>
    %cst_27 = arith.constant 1.000000e+00 : f32
    %cst_28 = arith.constant 0.000000e+00 : f32
    %32 = arith.select %26, %cst_27, %cst_28 : f32
    %33 = vector.broadcast %32 : f32 to vector<1x8x8xf32>
    %34 = arith.mulf %31, %33 : vector<1x8x8xf32>
    %c5 = arith.constant 5 : index
    %c1_29 = arith.constant 1 : index
    %c0_30 = arith.constant 0 : index
    %35 = vector.load %arg7[%c5, %c1_29, %c0_30] : memref<6x10x8xf32, #tpu.memory_space<vmem>>, vector<1x8x8xf32>
    tpu.vector_store %arg7[%c5, %c1_29, %c0_30], %34 {strides = array<i32>} : memref<6x10x8xf32, #tpu.memory_space<vmem>>, vector<1x8x8xf32>,
    %c0_31 = arith.constant 0 : index
    %c0_32 = arith.constant 0 : index
    %c0_33 = arith.constant 0 : index
    %36 = vector.load %arg7[%c0_31, %c0_32, %c0_33] : memref<6x10x8xf32, #tpu.memory_space<vmem>>, vector<4x8x8xf32>
    %37 = vector.shape_cast %36 : vector<4x8x8xf32> to vector<32x8xf32>
    %38 = arith.truncf %37 : vector<32x8xf32> to vector<32x8xbf16>
    %c0_34 = arith.constant 0 : index
    %c0_35 = arith.constant 0 : index
    %39 = vector.load %arg8[%c0_34, %c0_35] : memref<32x72xbf16, #tpu.memory_space<vmem>>, vector<32x8xbf16>
    tpu.vector_store %arg8[%c0_34, %c0_35], %38 {strides = array<i32>} : memref<32x72xbf16, #tpu.memory_space<vmem>>, vector<32x8xbf16>,
    %c0_36 = arith.constant 0 : index
    %c1_37 = arith.constant 1 : index
    %c0_38 = arith.constant 0 : index
    %40 = vector.load %arg7[%c0_36, %c1_37, %c0_38] : memref<6x10x8xf32, #tpu.memory_space<vmem>>, vector<4x8x8xf32>
    %41 = vector.shape_cast %40 : vector<4x8x8xf32> to vector<32x8xf32>
    %42 = arith.truncf %41 : vector<32x8xf32> to vector<32x8xbf16>
    %c0_39 = arith.constant 0 : index
    %c8 = arith.constant 8 : index
    %43 = vector.load %arg8[%c0_39, %c8] : memref<32x72xbf16, #tpu.memory_space<vmem>>, vector<32x8xbf16>
    tpu.vector_store %arg8[%c0_39, %c8], %42 {strides = array<i32>} : memref<32x72xbf16, #tpu.memory_space<vmem>>, vector<32x8xbf16>,
    %c0_40 = arith.constant 0 : index
    %c2 = arith.constant 2 : index
    %c0_41 = arith.constant 0 : index
    %44 = vector.load %arg7[%c0_40, %c2, %c0_41] : memref<6x10x8xf32, #tpu.memory_space<vmem>>, vector<4x8x8xf32>
    %45 = vector.shape_cast %44 : vector<4x8x8xf32> to vector<32x8xf32>
    %46 = arith.truncf %45 : vector<32x8xf32> to vector<32x8xbf16>
    %c0_42 = arith.constant 0 : index
    %c16 = arith.constant 16 : index
    %47 = vector.load %arg8[%c0_42, %c16] : memref<32x72xbf16, #tpu.memory_space<vmem>>, vector<32x8xbf16>
    tpu.vector_store %arg8[%c0_42, %c16], %46 {strides = array<i32>} : memref<32x72xbf16, #tpu.memory_space<vmem>>, vector<32x8xbf16>,
    %c1_43 = arith.constant 1 : index
    %c0_44 = arith.constant 0 : index
    %c0_45 = arith.constant 0 : index
    %48 = vector.load %arg7[%c1_43, %c0_44, %c0_45] : memref<6x10x8xf32, #tpu.memory_space<vmem>>, vector<4x8x8xf32>
    %49 = vector.shape_cast %48 : vector<4x8x8xf32> to vector<32x8xf32>
    %50 = arith.truncf %49 : vector<32x8xf32> to vector<32x8xbf16>
    %c0_46 = arith.constant 0 : index
    %c24 = arith.constant 24 : index
    %51 = vector.load %arg8[%c0_46, %c24] : memref<32x72xbf16, #tpu.memory_space<vmem>>, vector<32x8xbf16>
    tpu.vector_store %arg8[%c0_46, %c24], %50 {strides = array<i32>} : memref<32x72xbf16, #tpu.memory_space<vmem>>, vector<32x8xbf16>,
    %c1_47 = arith.constant 1 : index
    %c1_48 = arith.constant 1 : index
    %c0_49 = arith.constant 0 : index
    %52 = vector.load %arg7[%c1_47, %c1_48, %c0_49] : memref<6x10x8xf32, #tpu.memory_space<vmem>>, vector<4x8x8xf32>
    %53 = vector.shape_cast %52 : vector<4x8x8xf32> to vector<32x8xf32>
    %54 = arith.truncf %53 : vector<32x8xf32> to vector<32x8xbf16>
    %c0_50 = arith.constant 0 : index
    %c32 = arith.constant 32 : index
    %55 = vector.load %arg8[%c0_50, %c32] : memref<32x72xbf16, #tpu.memory_space<vmem>>, vector<32x8xbf16>
    tpu.vector_store %arg8[%c0_50, %c32], %54 {strides = array<i32>} : memref<32x72xbf16, #tpu.memory_space<vmem>>, vector<32x8xbf16>,
    %c1_51 = arith.constant 1 : index
    %c2_52 = arith.constant 2 : index
    %c0_53 = arith.constant 0 : index
    %56 = vector.load %arg7[%c1_51, %c2_52, %c0_53] : memref<6x10x8xf32, #tpu.memory_space<vmem>>, vector<4x8x8xf32>
    %57 = vector.shape_cast %56 : vector<4x8x8xf32> to vector<32x8xf32>
    %58 = arith.truncf %57 : vector<32x8xf32> to vector<32x8xbf16>
    %c0_54 = arith.constant 0 : index
    %c40 = arith.constant 40 : index
    %59 = vector.load %arg8[%c0_54, %c40] : memref<32x72xbf16, #tpu.memory_space<vmem>>, vector<32x8xbf16>
    tpu.vector_store %arg8[%c0_54, %c40], %58 {strides = array<i32>} : memref<32x72xbf16, #tpu.memory_space<vmem>>, vector<32x8xbf16>,
    %c2_55 = arith.constant 2 : index
    %c0_56 = arith.constant 0 : index
    %c0_57 = arith.constant 0 : index
    %60 = vector.load %arg7[%c2_55, %c0_56, %c0_57] : memref<6x10x8xf32, #tpu.memory_space<vmem>>, vector<4x8x8xf32>
    %61 = vector.shape_cast %60 : vector<4x8x8xf32> to vector<32x8xf32>
    %62 = arith.truncf %61 : vector<32x8xf32> to vector<32x8xbf16>
    %c0_58 = arith.constant 0 : index
    %c48 = arith.constant 48 : index
    %63 = vector.load %arg8[%c0_58, %c48] : memref<32x72xbf16, #tpu.memory_space<vmem>>, vector<32x8xbf16>
    tpu.vector_store %arg8[%c0_58, %c48], %62 {strides = array<i32>} : memref<32x72xbf16, #tpu.memory_space<vmem>>, vector<32x8xbf16>,
    %c2_59 = arith.constant 2 : index
    %c1_60 = arith.constant 1 : index
    %c0_61 = arith.constant 0 : index
    %64 = vector.load %arg7[%c2_59, %c1_60, %c0_61] : memref<6x10x8xf32, #tpu.memory_space<vmem>>, vector<4x8x8xf32>
    %65 = vector.shape_cast %64 : vector<4x8x8xf32> to vector<32x8xf32>
    %66 = arith.truncf %65 : vector<32x8xf32> to vector<32x8xbf16>
    %c0_62 = arith.constant 0 : index
    %c56 = arith.constant 56 : index
    %67 = vector.load %arg8[%c0_62, %c56] : memref<32x72xbf16, #tpu.memory_space<vmem>>, vector<32x8xbf16>
    tpu.vector_store %arg8[%c0_62, %c56], %66 {strides = array<i32>} : memref<32x72xbf16, #tpu.memory_space<vmem>>, vector<32x8xbf16>,
    %c2_63 = arith.constant 2 : index
    %c2_64 = arith.constant 2 : index
    %c0_65 = arith.constant 0 : index
    %68 = vector.load %arg7[%c2_63, %c2_64, %c0_65] : memref<6x10x8xf32, #tpu.memory_space<vmem>>, vector<4x8x8xf32>
    %69 = vector.shape_cast %68 : vector<4x8x8xf32> to vector<32x8xf32>
    %70 = arith.truncf %69 : vector<32x8xf32> to vector<32x8xbf16>
    %c0_66 = arith.constant 0 : index
    %c64 = arith.constant 64 : index
    %71 = vector.load %arg8[%c0_66, %c64] : memref<32x72xbf16, #tpu.memory_space<vmem>>, vector<32x8xbf16>
    tpu.vector_store %arg8[%c0_66, %c64], %70 {strides = array<i32>} : memref<32x72xbf16, #tpu.memory_space<vmem>>, vector<32x8xbf16>,
    %c0_67 = arith.constant 0 : index
    %c0_68 = arith.constant 0 : index
    %72 = vector.load %arg8[%c0_67, %c0_68] : memref<32x72xbf16, #tpu.memory_space<vmem>>, vector<32x72xbf16>
    %c0_69 = arith.constant 0 : index
    %c0_70 = arith.constant 0 : index
    %73 = vector.load %arg3[%c0_69, %c0_70] : memref<72x32xbf16, #tpu.memory_space<vmem>>, vector<72x32xbf16>
    %cst_71 = arith.constant dense<0.000000e+00> : vector<32x32xf32>
    %74 = tpu.matmul %72, %73, %cst_71 {dimension_numbers = #tpu.dot_dimension_numbers<[1], [0], [0], [1], [0, 0, 1, 1], [], []>} : vector<32x72xbf16>, vector<72x32xbf16>, vector<32x32xf32> -> vector<32x32xf32>
    %c0_72 = arith.constant 0 : index
    %c0_73 = arith.constant 0 : index
    %75 = vector.load %arg4[%c0_72, %c0_73] : memref<1x32xf32, #tpu.memory_space<vmem>>, vector<1x32xf32>
    %76 = vector.broadcast %75 : vector<1x32xf32> to vector<32x32xf32>
    %77 = arith.mulf %74, %76 : vector<32x32xf32>
    %c0_74 = arith.constant 0 : index
    %c0_75 = arith.constant 0 : index
    %78 = vector.load %arg5[%c0_74, %c0_75] : memref<1x32xf32, #tpu.memory_space<vmem>>, vector<1x32xf32>
    %79 = vector.broadcast %78 : vector<1x32xf32> to vector<32x32xf32>
    %80 = arith.addf %77, %79 : vector<32x32xf32>
    %cst_76 = arith.constant 0.000000e+00 : f32
    %81 = vector.broadcast %cst_76 : f32 to vector<32x32xf32>
    %82 = arith.maximumf %80, %81 : vector<32x32xf32>
    %83 = vector.shape_cast %82 : vector<32x32xf32> to vector<1x4x8x32xf32>
    %84 = arith.truncf %83 : vector<1x4x8x32xf32> to vector<1x4x8x32xbf16>
    %c0_77 = arith.constant 0 : index
    %c0_78 = arith.constant 0 : index
    %c0_79 = arith.constant 0 : index
    %c0_80 = arith.constant 0 : index
    %85 = vector.load %arg6[%c0_77, %c0_78, %c0_79, %c0_80] : memref<1x4x8x32xbf16, #tpu.memory_space<vmem>>, vector<1x4x8x32xbf16>
    tpu.vector_store %arg6[%c0_77, %c0_78, %c0_79, %c0_80], %84 {strides = array<i32>} : memref<1x4x8x32xbf16, #tpu.memory_space<vmem>>, vector<1x4x8x32xbf16>,
    return
  }
  func.func @transform_0(%arg0: i32, %arg1: i32) -> (i32, i32, i32, i32) {
    %c0_i32 = arith.constant 0 : i32
    %c0_i32_0 = arith.constant 0 : i32
    %c0_i32_1 = arith.constant 0 : i32
    %c0_i32_2 = arith.constant 0 : i32
    return %arg0, %c0_i32, %c0_i32_0, %c0_i32_1 : i32, i32, i32, i32
  }
  func.func @transform_1(%arg0: i32, %arg1: i32) -> (i32, i32) {
    %c0_i32 = arith.constant 0 : i32
    %c0_i32_0 = arith.constant 0 : i32
    %c0_i32_1 = arith.constant 0 : i32
    return %c0_i32, %c0_i32_0 : i32, i32
  }
  func.func @transform_2(%arg0: i32, %arg1: i32) -> (i32, i32) {
    %c0_i32 = arith.constant 0 : i32
    %c0_i32_0 = arith.constant 0 : i32
    %c0_i32_1 = arith.constant 0 : i32
    return %c0_i32, %c0_i32_0 : i32, i32
  }
  func.func @transform_3(%arg0: i32, %arg1: i32) -> (i32, i32) {
    %c0_i32 = arith.constant 0 : i32
    %c0_i32_0 = arith.constant 0 : i32
    %c0_i32_1 = arith.constant 0 : i32
    return %c0_i32, %c0_i32_0 : i32, i32
  }
  func.func @transform_4(%arg0: i32, %arg1: i32) -> (i32, i32, i32, i32) {
    %c0_i32 = arith.constant 0 : i32
    %c0_i32_0 = arith.constant 0 : i32
    %c0_i32_1 = arith.constant 0 : i32
    return %arg0, %arg1, %c0_i32, %c0_i32_0 : i32, i32, i32, i32
  }
}

</mosaic_0001>

<llo_original>
// kernel: tpu_custom_call.1
$region0: #{tpu_custom_call.1}
  #allocation0 [shape = 'u32[]', space=smem, size = 0x4, offset = 0x4, fixed_abs, tag = 'smem constant byte address 0x4 - core index']
  #allocation1 [shape = 'u32[72,128]{1,0:T(1,128)}', space=vmem, size = 0x9000, scoped, tag = 'internal scratch']
  #allocation2 [shape = 'f32[6,10,8]{2,1,0:T(8,128)}', space=vmem, size = 0xc000, scoped, tag = 'scratch operand']
  #allocation3 [shape = 'bf16[32,72]{1,0:T(8,128)(2,1)}', space=vmem, size = 0x2000, scoped, tag = 'scratch operand']
  %s0 = inlined_call_operand.hbm [shape: f32[2,8,8,8], index: 0, kind: input, shape index: {}]
  %s1 = inlined_call_operand.vmem [shape: bf16[72,32], index: 1, kind: input, shape index: {}]
  %s2 = inlined_call_operand.vmem [shape: f32[1,32], index: 2, kind: input, shape index: {}]
  %s3 = inlined_call_operand.vmem [shape: f32[1,32], index: 3, kind: input, shape index: {}]
  %s4 = inlined_call_operand.hbm [shape: bf16[2,8,8,32], index: 4, kind: output, shape index: {}]
  %s5 = sld [smem:[#allocation0]]
  $region53: #{tpu_custom_call.1} parent=0
    _
  %s7 = ssub.s32 1, %s5
  %s8 = scalar_select 0, %s7, %s5
  $region1: #{tpu_custom_call.1} parent=0
    #allocation4 [shape = 'u8[65536]{0}', space=vmem, size = 0x10000, scoped, tag = 'input window, operand 0']
    #allocation5 [shape = 's32[2]{0}', space=sflag, size = 0x8, scoped, tag = 'scoped memory for tpu_custom_call.1']
    #allocation6 [shape = 's32[2]{0}', space=sflag, size = 0x8, scoped, tag = 'scoped memory for tpu_custom_call.1']
    #allocation7 [shape = 'u8[16384]{0}', space=vmem, size = 0x4000, scoped, tag = 'output window, operand 0']
    %9 = vsyncpa [#allocation5], 0
    %s10 = scalar_lea.sflag [#allocation5], 1
    %11 = vsyncpa %s10, 0
    %12 = vsyncpa [#allocation6], 0
    %s13 = scalar_lea.sflag [#allocation6], 1
    %14 = vsyncpa %s13, 0
    loop: start=0, step=1, limit=6
    $region2: #{tpu_custom_call.1} parent=1 // loop_pre_header
      _
    $region3: #{tpu_custom_call.1} parent=1 // loop_header
      %s16 = sphi 0, %s20
      %p17 = scmp.ge.s32.totalorder %s16, 6
      %s23 = sphi 0, %s35
      %s24 = sphi 0, %s31
      %s25 = sphi 0, %s23
      %s26 = sphi 0, %s24
      %s27 = sphi 0, %s25
      %s28 = sphi 0, %s26
      %s38 = sphi 0, %s40
      %s41 = sphi 0, %s38
      %s42 = sphi 0, %s41
      %s58 = sphi 0, %s42
      %s62 = sphi 0, %s62
      %s64 = sphi 0, %s62
      %s65 = sphi 0, %s64
      %s79 = sphi 0, %s65
      %s83 = sphi 0, %s83
      %s85 = sphi 0, %s83
      %s86 = sphi 0, %s85
      %s100 = sphi 0, %s86
      %s104 = sphi 0, %s104
      %s106 = sphi 0, %s104
      %s107 = sphi 0, %s106
      %s121 = sphi 0, %s107
      %s129 = sphi 0, %s131
      %s132 = sphi 0, %s129
      %s133 = sphi 0, %s132
      %s149 = sphi 0, %s133
    $region4: #{tpu_custom_call.1} parent=1 // loop_header_branch
      %19 = sbr.rel (%p17) target = $region8
    $region5: #{tpu_custom_call.1} parent=1 // loop_body
      %s21 = ssub.s32 %s16, 1
      %s22 = ssub.s32 %s16, 2
      %s29 = sadd.s32 1, %s24
      %p30 = scmp.ge.s32.totalorder %s29, 2
      %s31 = scalar_select %p30, 0, %s29
      %s32 = sadd.s32 1, %s23
      %s33 = scalar_select %p30, %s32, %s23
      %p34 = scmp.ge.s32.totalorder %s33, 2
      %s35 = scalar_select %p34, 0, %s33
      %s36 = ssub.s32 %s23, %s35
      %p37 = scmp.eq.s32.totalorder %s36, 0
      %s39 = sadd.s32 %s38, 1
      %s40 = scalar_select %p37, %s38, %s39
      %p43 = pneg %p37
      %p44 = scmp.eq.s32.totalorder %s16, 3
      %p45 = por %p43, %p44
      %p46 = scmp.ne.s32.totalorder %s38, %s41
      %p47 = scmp.eq.s32.totalorder %s16, 0
      %p48 = por %p46, %p47
      %p49 = scmp.ne.s32.totalorder %s38, %s41
      %p50 = scmp.eq.s32.totalorder %s21, 3
      %p51 = por %p49, %p50
      %p52 = scmp.ne.s32.totalorder %s41, %s42
      %p53 = scmp.eq.s32.totalorder %s21, 0
      %p54 = por %p52, %p53
      %p55 = scmp.ne.s32.totalorder %s41, %s42
      %p56 = scmp.eq.s32.totalorder %s22, 3
      %p57 = por %p55, %p56
      %p59 = scmp.ne.s32.totalorder %s42, %s58
      %p60 = scmp.eq.s32.totalorder %s22, 0
      %p61 = por %p59, %p60
      %s63 = sadd.s32 %s62, 1
      %p66 = scmp.eq.s32.totalorder %s16, 3
      %p67 = scmp.ne.s32.totalorder %s62, %s64
      %p68 = scmp.eq.s32.totalorder %s16, 0
      %p69 = por %p67, %p68
      %p70 = scmp.ne.s32.totalorder %s62, %s64
      %p71 = scmp.eq.s32.totalorder %s21, 3
      %p72 = por %p70, %p71
      %p73 = scmp.ne.s32.totalorder %s64, %s65
      %p74 = scmp.eq.s32.totalorder %s21, 0
      %p75 = por %p73, %p74
      %p76 = scmp.ne.s32.totalorder %s64, %s65
      %p77 = scmp.eq.s32.totalorder %s22, 3
      %p78 = por %p76, %p77
      %p80 = scmp.ne.s32.totalorder %s65, %s79
      %p81 = scmp.eq.s32.totalorder %s22, 0
      %p82 = por %p80, %p81
      %s84 = sadd.s32 %s83, 1
      %p87 = scmp.eq.s32.totalorder %s16, 3
      %p88 = scmp.ne.s32.totalorder %s83, %s85
      %p89 = scmp.eq.s32.totalorder %s16, 0
      %p90 = por %p88, %p89
      %p91 = scmp.ne.s32.totalorder %s83, %s85
      %p92 = scmp.eq.s32.totalorder %s21, 3
      %p93 = por %p91, %p92
      %p94 = scmp.ne.s32.totalorder %s85, %s86
      %p95 = scmp.eq.s32.totalorder %s21, 0
      %p96 = por %p94, %p95
      %p97 = scmp.ne.s32.totalorder %s85, %s86
      %p98 = scmp.eq.s32.totalorder %s22, 3
      %p99 = por %p97, %p98
      %p101 = scmp.ne.s32.totalorder %s86, %s100
      %p102 = scmp.eq.s32.totalorder %s22, 0
      %p103 = por %p101, %p102
      %s105 = sadd.s32 %s104, 1
      %p108 = scmp.eq.s32.totalorder %s16, 3
      %p109 = scmp.ne.s32.totalorder %s104, %s106
      %p110 = scmp.eq.s32.totalorder %s16, 0
      %p111 = por %p109, %p110
      %p112 = scmp.ne.s32.totalorder %s104, %s106
      %p113 = scmp.eq.s32.totalorder %s21, 3
      %p114 = por %p112, %p113
      %p115 = scmp.ne.s32.totalorder %s106, %s107
      %p116 = scmp.eq.s32.totalorder %s21, 0
      %p117 = por %p115, %p116
      %p118 = scmp.ne.s32.totalorder %s106, %s107
      %p119 = scmp.eq.s32.totalorder %s22, 3
      %p120 = por %p118, %p119
      %p122 = scmp.ne.s32.totalorder %s107, %s121
      %p123 = scmp.eq.s32.totalorder %s22, 0
      %p124 = por %p122, %p123
      %s125 = ssub.s32 %s23, %s35
      %s126 = ssub.s32 %s24, %s31
      %s127 = sor.u32 %s125, %s126
      %p128 = scmp.eq.s32.totalorder %s127, 0
      %s130 = sadd.s32 %s129, 1
      %s131 = scalar_select %p128, %s129, %s130
      %p134 = pneg %p128
      %p135 = scmp.eq.s32.totalorder %s16, 3
      %p136 = por %p134, %p135
      %p137 = scmp.ne.s32.totalorder %s129, %s132
      %p138 = scmp.eq.s32.totalorder %s16, 0
      %p139 = por %p137, %p138
      %p140 = scmp.ne.s32.totalorder %s129, %s132
      %p141 = scmp.eq.s32.totalorder %s21, 3
      %p142 = por %p140, %p141
      %p143 = scmp.ne.s32.totalorder %s132, %s133
      %p144 = scmp.eq.s32.totalorder %s21, 0
      %p145 = por %p143, %p144
      %p146 = scmp.ne.s32.totalorder %s132, %s133
      %p147 = scmp.eq.s32.totalorder %s22, 3
      %p148 = por %p146, %p147
      %p150 = scmp.ne.s32.totalorder %s133, %s149
      %p151 = scmp.eq.s32.totalorder %s22, 0
      %p152 = por %p150, %p151
      %p153 = scmp.le.s32.totalorder 1, %s16
      %p154 = scmp.lt.s32.totalorder %s16, 5
      %p155 = pnand %p153, %p154
      %p156 = pneg %p155
      // Predicated region
      $region9: #{tpu_custom_call.1} parent=5 // pred_check
        _
      $region10: #{tpu_custom_call.1} parent=5 // pred_check_branch
        %158 = sbr.rel (%p155) target = $region12
      $region11: #{tpu_custom_call.1} parent=5 // pred_region
        %s159 = ssub.s32 %s16, 1
        // Predicated region
        $region13: #{tpu_custom_call.1} parent=11 // pred_check
          %p160 = pneg %p75
        $region14: #{tpu_custom_call.1} parent=11 // pred_check_branch
          %162 = sbr.rel (%p160) target = $region16
        $region15: #{tpu_custom_call.1} parent=11 // pred_region
          _
        $region16: #{tpu_custom_call.1} parent=11 // pred_fallthru
          _
        // Predicated region
        $region17: #{tpu_custom_call.1} parent=11 // pred_check
          %p163 = pneg %p96
        $region18: #{tpu_custom_call.1} parent=11 // pred_check_branch
          %165 = sbr.rel (%p163) target = $region20
        $region19: #{tpu_custom_call.1} parent=11 // pred_region
          _
        $region20: #{tpu_custom_call.1} parent=11 // pred_fallthru
          _
        // Predicated region
        $region21: #{tpu_custom_call.1} parent=11 // pred_check
          %p166 = pneg %p117
        $region22: #{tpu_custom_call.1} parent=11 // pred_check_branch
          %168 = sbr.rel (%p166) target = $region24
        $region23: #{tpu_custom_call.1} parent=11 // pred_region
          _
        $region24: #{tpu_custom_call.1} parent=11 // pred_fallthru
          _
      $region12: #{tpu_custom_call.1} parent=5 // pred_fallthru
        _
      %p169 = scmp.lt.s32.totalorder %s16, 4
      // Predicated region
      $region25: #{tpu_custom_call.1} parent=5 // pred_check
        %p170 = pneg %p169
      $region26: #{tpu_custom_call.1} parent=5 // pred_check_branch
        %172 = sbr.rel (%p170) target = $region28
      $region27: #{tpu_custom_call.1} parent=5 // pred_region
        // Predicated region
        $region29: #{tpu_custom_call.1} parent=27 // pred_check
          %p173 = pneg %p48
        $region30: #{tpu_custom_call.1} parent=27 // pred_check_branch
          %175 = sbr.rel (%p173) target = $region32
        $region31: #{tpu_custom_call.1} parent=27 // pred_region
          %s176 = sand.u32 %s38, 1
          %s177 = scalar_lea.sflag [#allocation5], %s176
          %s178 = sand.u32 %s38, 1
          %s179 = smul.addr %s178, 64
          %s180 = scalar_lea.vmem [#allocation4], %s179
          %182 = vsyncadd %s177, 0
          %s183 = smul.addr %s23, 8
          %s184 = smul.addr %s183, 8
          %s185 = scalar_lea.hbm %s0, %s184
          %s186 = sshll.u32 %s185, 4
          %s187 = int_to_ptr.hbm [resolvable:$true] %s186
          %s188 = sshll.u32 %s180, 4
          %s189 = int_to_ptr.vmem [resolvable:$true] %s188
          %194 = dma.hbm_to_vmem [thread:$0]  %s187, 1024, %s189, %s177, 128, 128, 8
        $region32: #{tpu_custom_call.1} parent=27 // pred_fallthru
          _
      $region28: #{tpu_custom_call.1} parent=5 // pred_fallthru
        _
      %p195 = scmp.le.s32.totalorder 1, %s16
      %p196 = scmp.lt.s32.totalorder %s16, 5
      %p197 = pnand %p195, %p196
      %p198 = pneg %p197
      // Predicated region
      $region33: #{tpu_custom_call.1} parent=5 // pred_check
        _
      $region34: #{tpu_custom_call.1} parent=5 // pred_check_branch
        %200 = sbr.rel (%p197) target = $region36
      $region35: #{tpu_custom_call.1} parent=5 // pred_region
        %s201 = ssub.s32 %s16, 1
        %s202 = sand.u32 %s41, 1
        %s203 = scalar_lea.sflag [#allocation5], %s202
        %s204 = sand.u32 %s41, 1
        %s205 = smul.addr %s204, 64
        %s206 = scalar_lea.vmem [#allocation4], %s205
        // Predicated region
        $region37: #{tpu_custom_call.1} parent=35 // pred_check
          %p207 = pneg %p54
        $region38: #{tpu_custom_call.1} parent=35 // pred_check_branch
          %209 = sbr.rel (%p207) target = $region40
        $region39: #{tpu_custom_call.1} parent=35 // pred_region
          %211 = dma.done %s203, 1024
        $region40: #{tpu_custom_call.1} parent=35 // pred_fallthru
          _
        %s212 = sand.u32 %s41, 1
        %s213 = scalar_lea.sflag [#allocation5], %s212
        %s214 = sand.u32 %s41, 1
        %s215 = smul.addr %s214, 64
        %s216 = scalar_lea.vmem [#allocation4], %s215
        %p217 = pneg %p54
        %p218 = pneg %p51
        %p219 = pneg %p75
        %p220 = pneg %p72
        %p221 = pneg %p96
        %p222 = pneg %p93
        %p223 = pneg %p117
        %p224 = pneg %p114
        %p225 = pneg %p145
        %p226 = pneg %p142
        %s227 = sand.u32 %s132, 1
        %s228 = scalar_lea.sflag [#allocation6], %s227
        %s229 = sand.u32 %s132, 1
        %s230 = smul.addr %s229, 16
        %s231 = scalar_lea.vmem [#allocation7], %s230
        %s232 = smul.u32 4, %s26
        %s234 = smul.u32 %s26, 4
        %vm235 = vcmask 57344
        %236 = vst.msk [vmem:[#allocation2] sm:$0x1] %vm235, 0.0
        %237 = vst.msk [vmem:[#allocation2 + $0x10] sm:$0x1] %vm235, 0.0
        %238 = vst.msk [vmem:[#allocation2 + $0x20] sm:$0x1] %vm235, 0.0
        %239 = vst.msk [vmem:[#allocation2 + $0x30] sm:$0x1] %vm235, 0.0
        %240 = vst.msk [vmem:[#allocation2 + $0x40] sm:$0x1] %vm235, 0.0
        %241 = vst.msk [vmem:[#allocation2 + $0x50] sm:$0x1] %vm235, 0.0
        %242 = vst.msk [vmem:[#allocation2 + $0x9] sm:$0x1] %vm235, 0.0
        %243 = vst.msk [vmem:[#allocation2 + $0x19] sm:$0x1] %vm235, 0.0
        %244 = vst.msk [vmem:[#allocation2 + $0x29] sm:$0x1] %vm235, 0.0
        %245 = vst.msk [vmem:[#allocation2 + $0x39] sm:$0x1] %vm235, 0.0
        %246 = vst.msk [vmem:[#allocation2 + $0x49] sm:$0x1] %vm235, 0.0
        %247 = vst.msk [vmem:[#allocation2 + $0x59] sm:$0x1] %vm235, 0.0
        %s248 = ssub.s32 %s234, 1
        %p249 = scmp.ge.s32.totalorder %s248, 0
        %p250 = scmp.lt.s32.totalorder %s248, 8
        %p251 = pnand %p249, %p250
        %p252 = pneg %p251
        %p253 = scmp.gt.s32.totalorder %s248, 0
        %s254 = scalar_select %p253, %s248, 0
        %p255 = scmp.lt.s32.totalorder %s254, 7
        %s256 = scalar_select %p255, %s254, 7
        %s257 = smul.u32 %s256, 8
        %s258 = scalar_lea.vmem %s206, %s257 [#allocation4]
        %v259 = vld [vmem:[%s258] sm:$0xff]
        %s260 = scalar_select %p252, 1.0, 0.0
        %v261 = vstv %s260
        %v262 = vmul.f32 %v259, %v261
        %vm263 = vcmask 64512
        %264 = vst.msk [vmem:[#allocation2 + $0x1] sm:$0xff] %vm263, %v262
        %s265 = smul.u32 %s234, 8
        %s266 = scalar_lea.vmem %s206, %s265 [#allocation4]
        %v267 = vld [vmem:[%s266] sm:$0xff]
        %v268 = vld [vmem:[%s266 + $0x8] sm:$0xff]
        %v269 = vld [vmem:[%s266 + $0x10] sm:$0xff]
        %v270 = vld [vmem:[%s266 + $0x18] sm:$0xff]
        %s271 = scalar_lea.vmem [#allocation2], 16
        %272 = vst.msk [vmem:[%s271 + $0x1] sm:$0xff] %vm263, %v267
        %273 = vst.msk [vmem:[%s271 + $0x11] sm:$0xff] %vm263, %v268
        %274 = vst.msk [vmem:[%s271 + $0x21] sm:$0xff] %vm263, %v269
        %275 = vst.msk [vmem:[%s271 + $0x31] sm:$0xff] %vm263, %v270
        %s276 = sadd.s32 %s234, 4
        %p277 = scmp.ge.s32.totalorder %s276, 0
        %p278 = scmp.lt.s32.totalorder %s276, 8
        %p279 = pnand %p277, %p278
        %p280 = pneg %p279
        %p281 = scmp.gt.s32.totalorder %s276, 0
        %s282 = scalar_select %p281, %s276, 0
        %p283 = scmp.lt.s32.totalorder %s282, 7
        %s284 = scalar_select %p283, %s282, 7
        %s285 = smul.u32 %s284, 8
        %s286 = scalar_lea.vmem %s206, %s285 [#allocation4]
        %v287 = vld [vmem:[%s286] sm:$0xff]
        %s288 = scalar_select %p280, 1.0, 0.0
        %v289 = vstv %s288
        %v290 = vmul.f32 %v287, %v289
        %s291 = scalar_lea.vmem [#allocation2], 80
        %292 = vst.msk [vmem:[%s291 + $0x1] sm:$0xff] %vm263, %v290
        %v293 = vld [vmem:[#allocation2] sm:$0xff]
        %v294 = vld [vmem:[#allocation2 + $0x10] sm:$0xff]
        %v295 = vld [vmem:[#allocation2 + $0x20] sm:$0xff]
        %v296 = vld [vmem:[#allocation2 + $0x30] sm:$0xff]
        %v297 = vpack.c.bf16 %v293, %v293
        %v298 = vpack.c.bf16 %v294, %v294
        %v299 = vpack.c.bf16 %v295, %v295
        %v300 = vpack.c.bf16 %v296, %v296
        %vm301 = vcmask 60416
        %302 = vst.msk [vmem:[#allocation3] sm:$0xf] %vm301, %v297
        %303 = vst.msk [vmem:[#allocation3 + $0x4] sm:$0xf] %vm301, %v298
        %304 = vst.msk [vmem:[#allocation3 + $0x8] sm:$0xf] %vm301, %v299
        %305 = vst.msk [vmem:[#allocation3 + $0xc] sm:$0xf] %vm301, %v300
        %v306 = vld [vmem:[#allocation2 + $0x1] sm:$0xff]
        %v307 = vld [vmem:[#allocation2 + $0x11] sm:$0xff]
        %v308 = vld [vmem:[#allocation2 + $0x21] sm:$0xff]
        %v309 = vld [vmem:[#allocation2 + $0x31] sm:$0xff]
        %v310 = vpack.c.bf16 %v306, %v306
        %v311 = vpack.c.bf16 %v307, %v307
        %v312 = vpack.c.bf16 %v308, %v308
        %v313 = vpack.c.bf16 %v309, %v309
        %318 = vrot.lane.b32.xlu0 %v310, 8
        %v319 = vpop.permute.xlu0 %318
        %320 = vrot.lane.b32.xlu0 %v311, 8
        %v321 = vpop.permute.xlu0 %320
        %322 = vrot.lane.b32.xlu0 %v312, 8
        %v323 = vpop.permute.xlu0 %322
        %324 = vrot.lane.b32.xlu0 %v313, 8
        %v325 = vpop.permute.xlu0 %324
        %vm330 = vcmask 126016
        %331 = vst.msk [vmem:[#allocation3] sm:$0xf] %vm330, %v319
        %332 = vst.msk [vmem:[#allocation3 + $0x4] sm:$0xf] %vm330, %v321
        %333 = vst.msk [vmem:[#allocation3 + $0x8] sm:$0xf] %vm330, %v323
        %334 = vst.msk [vmem:[#allocation3 + $0xc] sm:$0xf] %vm330, %v325
        %v335 = vld [vmem:[#allocation2 + $0x2] sm:$0xff]
        %v336 = vld [vmem:[#allocation2 + $0x12] sm:$0xff]
        %v337 = vld [vmem:[#allocation2 + $0x22] sm:$0xff]
        %v338 = vld [vmem:[#allocation2 + $0x32] sm:$0xff]
        %v339 = vpack.c.bf16 %v335, %v335
        %v340 = vpack.c.bf16 %v336, %v336
        %v341 = vpack.c.bf16 %v337, %v337
        %v342 = vpack.c.bf16 %v338, %v338
        %347 = vrot.lane.b32.xlu0 %v339, 16
        %v348 = vpop.permute.xlu0 %347
        %349 = vrot.lane.b32.xlu0 %v340, 16
        %v350 = vpop.permute.xlu0 %349
        %351 = vrot.lane.b32.xlu0 %v341, 16
        %v352 = vpop.permute.xlu0 %351
        %353 = vrot.lane.b32.xlu0 %v342, 16
        %v354 = vpop.permute.xlu0 %353
        %vm359 = vcmask 191616
        %360 = vst.msk [vmem:[#allocation3] sm:$0xf] %vm359, %v348
        %361 = vst.msk [vmem:[#allocation3 + $0x4] sm:$0xf] %vm359, %v350
        %362 = vst.msk [vmem:[#allocation3 + $0x8] sm:$0xf] %vm359, %v352
        %363 = vst.msk [vmem:[#allocation3 + $0xc] sm:$0xf] %vm359, %v354
        %v364 = vld [vmem:[%s271] sm:$0xff]
        %v365 = vld [vmem:[%s271 + $0x10] sm:$0xff]
        %v366 = vld [vmem:[%s271 + $0x20] sm:$0xff]
        %v367 = vld [vmem:[%s271 + $0x30] sm:$0xff]
        %v368 = vpack.c.bf16 %v364, %v364
        %v369 = vpack.c.bf16 %v365, %v365
        %v370 = vpack.c.bf16 %v366, %v366
        %v371 = vpack.c.bf16 %v367, %v367
        %376 = vrot.lane.b32.xlu0 %v368, 24
        %v377 = vpop.permute.xlu0 %376
        %378 = vrot.lane.b32.xlu0 %v369, 24
        %v379 = vpop.permute.xlu0 %378
        %380 = vrot.lane.b32.xlu0 %v370, 24
        %v381 = vpop.permute.xlu0 %380
        %382 = vrot.lane.b32.xlu0 %v371, 24
        %v383 = vpop.permute.xlu0 %382
        %vm388 = vcmask 257216
        %389 = vst.msk [vmem:[#allocation3] sm:$0xf] %vm388, %v377
        %390 = vst.msk [vmem:[#allocation3 + $0x4] sm:$0xf] %vm388, %v379
        %391 = vst.msk [vmem:[#allocation3 + $0x8] sm:$0xf] %vm388, %v381
        %392 = vst.msk [vmem:[#allocation3 + $0xc] sm:$0xf] %vm388, %v383
        %v393 = vld [vmem:[%s271 + $0x1] sm:$0xff]
        %v394 = vld [vmem:[%s271 + $0x11] sm:$0xff]
        %v395 = vld [vmem:[%s271 + $0x21] sm:$0xff]
        %v396 = vld [vmem:[%s271 + $0x31] sm:$0xff]
        %v397 = vpack.c.bf16 %v393, %v393
        %v398 = vpack.c.bf16 %v394, %v394
        %v399 = vpack.c.bf16 %v395, %v395
        %v400 = vpack.c.bf16 %v396, %v396
        %405 = vrot.lane.b32.xlu0 %v397, 32
        %v406 = vpop.permute.xlu0 %405
        %407 = vrot.lane.b32.xlu0 %v398, 32
        %v408 = vpop.permute.xlu0 %407
        %409 = vrot.lane.b32.xlu0 %v399, 32
        %v410 = vpop.permute.xlu0 %409
        %411 = vrot.lane.b32.xlu0 %v400, 32
        %v412 = vpop.permute.xlu0 %411
        %vm417 = vcmask 322816
        %418 = vst.msk [vmem:[#allocation3] sm:$0xf] %vm417, %v406
        %419 = vst.msk [vmem:[#allocation3 + $0x4] sm:$0xf] %vm417, %v408
        %420 = vst.msk [vmem:[#allocation3 + $0x8] sm:$0xf] %vm417, %v410
        %421 = vst.msk [vmem:[#allocation3 + $0xc] sm:$0xf] %vm417, %v412
        %v422 = vld [vmem:[%s271 + $0x2] sm:$0xff]
        %v423 = vld [vmem:[%s271 + $0x12] sm:$0xff]
        %v424 = vld [vmem:[%s271 + $0x22] sm:$0xff]
        %v425 = vld [vmem:[%s271 + $0x32] sm:$0xff]
        %v426 = vpack.c.bf16 %v422, %v422
        %v427 = vpack.c.bf16 %v423, %v423
        %v428 = vpack.c.bf16 %v424, %v424
        %v429 = vpack.c.bf16 %v425, %v425
        %434 = vrot.lane.b32.xlu0 %v426, 40
        %v435 = vpop.permute.xlu0 %434
        %436 = vrot.lane.b32.xlu0 %v427, 40
        %v437 = vpop.permute.xlu0 %436
        %438 = vrot.lane.b32.xlu0 %v428, 40
        %v439 = vpop.permute.xlu0 %438
        %440 = vrot.lane.b32.xlu0 %v429, 40
        %v441 = vpop.permute.xlu0 %440
        %vm446 = vcmask 388416
        %447 = vst.msk [vmem:[#allocation3] sm:$0xf] %vm446, %v435
        %448 = vst.msk [vmem:[#allocation3 + $0x4] sm:$0xf] %vm446, %v437
        %449 = vst.msk [vmem:[#allocation3 + $0x8] sm:$0xf] %vm446, %v439
        %450 = vst.msk [vmem:[#allocation3 + $0xc] sm:$0xf] %vm446, %v441
        %s451 = scalar_lea.vmem [#allocation2], 32
        %v452 = vld [vmem:[%s451] sm:$0xff]
        %v453 = vld [vmem:[%s451 + $0x10] sm:$0xff]
        %v454 = vld [vmem:[%s451 + $0x20] sm:$0xff]
        %v455 = vld [vmem:[%s451 + $0x30] sm:$0xff]
        %v456 = vpack.c.bf16 %v452, %v452
        %v457 = vpack.c.bf16 %v453, %v453
        %v458 = vpack.c.bf16 %v454, %v454
        %v459 = vpack.c.bf16 %v455, %v455
        %464 = vrot.lane.b32.xlu0 %v456, 48
        %v465 = vpop.permute.xlu0 %464
        %466 = vrot.lane.b32.xlu0 %v457, 48
        %v467 = vpop.permute.xlu0 %466
        %468 = vrot.lane.b32.xlu0 %v458, 48
        %v469 = vpop.permute.xlu0 %468
        %470 = vrot.lane.b32.xlu0 %v459, 48
        %v471 = vpop.permute.xlu0 %470
        %vm476 = vcmask 454016
        %477 = vst.msk [vmem:[#allocation3] sm:$0xf] %vm476, %v465
        %478 = vst.msk [vmem:[#allocation3 + $0x4] sm:$0xf] %vm476, %v467
        %479 = vst.msk [vmem:[#allocation3 + $0x8] sm:$0xf] %vm476, %v469
        %480 = vst.msk [vmem:[#allocation3 + $0xc] sm:$0xf] %vm476, %v471
        %v481 = vld [vmem:[%s451 + $0x1] sm:$0xff]
        %v482 = vld [vmem:[%s451 + $0x11] sm:$0xff]
        %v483 = vld [vmem:[%s451 + $0x21] sm:$0xff]
        %v484 = vld [vmem:[%s451 + $0x31] sm:$0xff]
        %v485 = vpack.c.bf16 %v481, %v481
        %v486 = vpack.c.bf16 %v482, %v482
        %v487 = vpack.c.bf16 %v483, %v483
        %v488 = vpack.c.bf16 %v484, %v484
        %493 = vrot.lane.b32.xlu0 %v485, 56
        %v494 = vpop.permute.xlu0 %493
        %495 = vrot.lane.b32.xlu0 %v486, 56
        %v496 = vpop.permute.xlu0 %495
        %497 = vrot.lane.b32.xlu0 %v487, 56
        %v498 = vpop.permute.xlu0 %497
        %499 = vrot.lane.b32.xlu0 %v488, 56
        %v500 = vpop.permute.xlu0 %499
        %vm505 = vcmask 519616
        %506 = vst.msk [vmem:[#allocation3] sm:$0xf] %vm505, %v494
        %507 = vst.msk [vmem:[#allocation3 + $0x4] sm:$0xf] %vm505, %v496
        %508 = vst.msk [vmem:[#allocation3 + $0x8] sm:$0xf] %vm505, %v498
        %509 = vst.msk [vmem:[#allocation3 + $0xc] sm:$0xf] %vm505, %v500
        %v510 = vld [vmem:[%s451 + $0x2] sm:$0xff]
        %v511 = vld [vmem:[%s451 + $0x12] sm:$0xff]
        %v512 = vld [vmem:[%s451 + $0x22] sm:$0xff]
        %v513 = vld [vmem:[%s451 + $0x32] sm:$0xff]
        %v514 = vpack.c.bf16 %v510, %v510
        %v515 = vpack.c.bf16 %v511, %v511
        %v516 = vpack.c.bf16 %v512, %v512
        %v517 = vpack.c.bf16 %v513, %v513
        %522 = vrot.lane.b32.xlu0 %v514, 64
        %v523 = vpop.permute.xlu0 %522
        %524 = vrot.lane.b32.xlu0 %v515, 64
        %v525 = vpop.permute.xlu0 %524
        %526 = vrot.lane.b32.xlu0 %v516, 64
        %v527 = vpop.permute.xlu0 %526
        %528 = vrot.lane.b32.xlu0 %v517, 64
        %v529 = vpop.permute.xlu0 %528
        %vm534 = vcmask 585216
        %535 = vst.msk [vmem:[#allocation3] sm:$0xf] %vm534, %v523
        %536 = vst.msk [vmem:[#allocation3 + $0x4] sm:$0xf] %vm534, %v525
        %537 = vst.msk [vmem:[#allocation3 + $0x8] sm:$0xf] %vm534, %v527
        %538 = vst.msk [vmem:[#allocation3 + $0xc] sm:$0xf] %vm534, %v529
        %v539 = vld [vmem:[#allocation3] sm:$0xf]
        %v540 = vld [vmem:[#allocation3 + $0x4] sm:$0xf]
        %v541 = vld [vmem:[#allocation3 + $0x8] sm:$0xf]
        %v542 = vld [vmem:[#allocation3 + $0xc] sm:$0xf]
        %v543 = vld [vmem:[%s1] sm:$0xf]
        %v544 = vld [vmem:[%s1 + $0x4] sm:$0xf]
        %v545 = vld [vmem:[%s1 + $0x8] sm:$0xf]
        %v546 = vld [vmem:[%s1 + $0xc] sm:$0xf]
        %v547 = vld [vmem:[%s1 + $0x10] sm:$0xf]
        %v548 = vld [vmem:[%s1 + $0x14] sm:$0xf]
        %v549 = vld [vmem:[%s1 + $0x18] sm:$0xf]
        %v550 = vld [vmem:[%s1 + $0x1c] sm:$0xf]
        %v551 = vld [vmem:[%s1 + $0x20] sm:$0xf]
        %v556 = vunpack.c.l.b16 %v539
        %v557 = vunpack.c.l.b16 %v540
        %v558 = vunpack.c.l.b16 %v541
        %v559 = vunpack.c.l.b16 %v542
        %v560 = vpack.c.b16 %v557, %v556
        %v561 = vpack.c.b16 %v559, %v558
        %v571 = vunpack.c.l.b16 %v543
        %v572 = vunpack.c.l.b16 %v544
        %v573 = vunpack.c.l.b16 %v545
        %v574 = vunpack.c.l.b16 %v546
        %v575 = vunpack.c.l.b16 %v547
        %v576 = vunpack.c.l.b16 %v548
        %v577 = vunpack.c.l.b16 %v549
        %v578 = vunpack.c.l.b16 %v550
        %v579 = vunpack.c.l.b16 %v551
        %v580 = vpack.c.b16 %v572, %v571
        %v581 = vpack.c.b16 %v574, %v573
        %v582 = vpack.c.b16 %v576, %v575
        %v583 = vpack.c.b16 %v578, %v577
        %v584 = vpack.c.b16 %v579, %v579
        %vm589 = vcmask 588800
        %v591 = vsel %vm589, %v560, 0
        %v594 = vsel %vm589, %v561, 0
        %vm596 = vcmask 1043456
        %v598 = vsel %vm596, %v584, 0
        %600 = vmatpush.bf16.msra.mxu0 0
        %601 = vmatpush.bf16.msra.mxu0 0
        %602 = vmatpush.bf16.msra.mxu0 0
        %603 = vmatpush.bf16.msra.mxu0 %v598
        %604 = vmatpush.bf16.msra.mxu0 %v583
        %605 = vmatpush.bf16.msra.mxu0 %v582
        %606 = vmatpush.bf16.msra.mxu0 %v581
        %607 = vmatpush.bf16.msra.mxu0 %v580
        %608 = vmatmul.bf16.gmra.mxu0 %v591
        %v609 = vpop.f32.mrf.mxu0
        %v610 = vadd.f32 0.0, %v609
        %v611 = vpop.f32.mrf.mxu0
        %v612 = vadd.f32 0.0, %v611
        %613 = vmatmul.bf16.gmra.mxu0 %v594
        %v614 = vpop.f32.mrf.mxu0
        %v615 = vadd.f32 0.0, %v614
        %v616 = vpop.f32.mrf.mxu0
        %v617 = vadd.f32 0.0, %v616
        %618 = vdwg.mxu0
        %v619 = vld [vmem:[%s2] sm:$0x1]
        %v621 = vperm.slane %v619, 0
        %v623 = vmul.f32 %v610, %v621
        %v624 = vmul.f32 %v612, %v621
        %v625 = vmul.f32 %v615, %v621
        %v626 = vmul.f32 %v617, %v621
        %v627 = vld [vmem:[%s3] sm:$0x1]
        %v629 = vperm.slane %v627, 0
        %v631 = vadd.f32 %v623, %v629
        %v632 = vadd.f32 %v624, %v629
        %v633 = vadd.f32 %v625, %v629
        %v634 = vadd.f32 %v626, %v629
        %v635 = vmax.f32 %v631, 0.0
        %v636 = vmax.f32 %v632, 0.0
        %v637 = vmax.f32 %v633, 0.0
        %v638 = vmax.f32 %v634, 0.0
        %v639 = vpack.c.bf16 %v635, %v635
        %v640 = vpack.c.bf16 %v636, %v636
        %v641 = vpack.c.bf16 %v637, %v637
        %v642 = vpack.c.bf16 %v638, %v638
        %vm643 = vcmask 257024
        %644 = vst.msk [vmem:[%s231] sm:$0xf] %vm643, %v639
        %645 = vst.msk [vmem:[%s231 + $0x4] sm:$0xf] %vm643, %v640
        %646 = vst.msk [vmem:[%s231 + $0x8] sm:$0xf] %vm643, %v641
        %647 = vst.msk [vmem:[%s231 + $0xc] sm:$0xf] %vm643, %v642
        %s648 = sand.u32 %s132, 1
        %s649 = scalar_lea.sflag [#allocation6], %s648
        %s650 = sand.u32 %s132, 1
        %s651 = smul.addr %s650, 16
        %s652 = scalar_lea.vmem [#allocation7], %s651
        // Predicated region
        $region41: #{tpu_custom_call.1} parent=35 // pred_check
          %p653 = pneg %p142
        $region42: #{tpu_custom_call.1} parent=35 // pred_check_branch
          %655 = sbr.rel (%p653) target = $region44
        $region43: #{tpu_custom_call.1} parent=35 // pred_region
          %s656 = smul.u32 4, %s26
          %658 = vsyncadd %s649, 0
          %s659 = smul.addr %s25, 8
          %s660 = sadd.s32 %s656, %s659
          %s661 = smul.addr %s660, 4
          %s662 = scalar_lea.hbm %s4, %s661
          %s663 = sshll.u32 %s652, 4
          %s664 = int_to_ptr.vmem [resolvable:$true] %s663
          %s665 = sshll.u32 %s662, 4
          %s666 = int_to_ptr.hbm [resolvable:$true] %s665
          %671 = dma.vmem_to_hbm [thread:$0]  %s664, 256, %s666, %s649, 64, 64, 4
        $region44: #{tpu_custom_call.1} parent=35 // pred_fallthru
          _
      $region36: #{tpu_custom_call.1} parent=5 // pred_fallthru
        _
      %p672 = scmp.le.s32.totalorder 2, %s16
      // Predicated region
      $region45: #{tpu_custom_call.1} parent=5 // pred_check
        %p673 = pneg %p672
      $region46: #{tpu_custom_call.1} parent=5 // pred_check_branch
        %675 = sbr.rel (%p673) target = $region48
      $region47: #{tpu_custom_call.1} parent=5 // pred_region
        %s676 = ssub.s32 %s16, 2
        // Predicated region
        $region49: #{tpu_custom_call.1} parent=47 // pred_check
          %p677 = pneg %p148
        $region50: #{tpu_custom_call.1} parent=47 // pred_check_branch
          %679 = sbr.rel (%p677) target = $region52
        $region51: #{tpu_custom_call.1} parent=47 // pred_region
          %s680 = sand.u32 %s133, 1
          %s681 = scalar_lea.sflag [#allocation6], %s680
          %s682 = sand.u32 %s133, 1
          %s683 = smul.addr %s682, 16
          %s684 = scalar_lea.vmem [#allocation7], %s683
          %686 = dma.done %s681, 256
        $region52: #{tpu_custom_call.1} parent=47 // pred_fallthru
          _
      $region48: #{tpu_custom_call.1} parent=5 // pred_fallthru
        _
    $region6: #{tpu_custom_call.1} parent=1 // loop_footer
      %s20 = sadd.s32 1, %s16
    $region7: #{tpu_custom_call.1} parent=1 // loop_footer_branch
      %15 = sbr.rel target = $region3
    $region8: #{tpu_custom_call.1} parent=1 // loop_exit
      _
    %687 = vsyncpa [#allocation5], 1
    %s688 = scalar_lea.sflag [#allocation5], 1
    %689 = vsyncpa %s688, 1
    %690 = vsyncpa [#allocation6], 1
    %s691 = scalar_lea.sflag [#allocation6], 1
    %692 = vsyncpa %s691, 1

</llo_original>
